<compile_context>
chip_gen: v7x
topology: tpu7x:2x2x1
jax: 0.10.0
libtpu: 0.0.40
codegen_flags: <defaults>
</compile_context>

<pallas_src>
import jax
import jax.numpy as jnp
from jax.experimental import pallas as pl
from jax.experimental.pallas import tpu as pltpu


def _value_mlp_kernel(x_ref, w1_ref, b1_ref, w2_ref, b2_ref, w3_ref, b3_ref, o_ref):
    x = x_ref[...]                                                    # (TB, obs) f32
    # Layer 1: Linear(obs, 24) + ReLU  (MXU, f32 accumulation)
    h1 = jnp.dot(x, w1_ref[...], preferred_element_type=jnp.float32) + b1_ref[...]
    h1 = jnp.maximum(h1, 0.0)                                         # (TB, 24)
    # Layer 2: Linear(24, 48) + ReLU
    h2 = jnp.dot(h1, w2_ref[...], preferred_element_type=jnp.float32) + b2_ref[...]
    h2 = jnp.maximum(h2, 0.0)                                         # (TB, 48)
    # Layer 3: Linear(48, 1). N=1 would waste MXU result lanes, so do it as a
    # VPU multiply + XLU lane-sum (both slots are otherwise idle here).
    out = jnp.sum(h2 * w3_ref[...], axis=-1, keepdims=True) + b3_ref[...]   # (TB, 1)
    o_ref[...] = out.astype(o_ref.dtype)


def _round_up(n, m):
    return ((n + m - 1) // m) * m


def value_approximator_forward(x, params, *, tile_b=None):
    """Forward pass of ValueApproximator.

    x: (B, observation_size) float32 -> (B, 1) float32.
    Note: for tiny batches the plain-jnp `reference_forward` is faster than any
    Pallas launch; this kernel targets large-batch rollout / training paths.
    """
    B, obs = x.shape
    w1, b1, w2, b2, w3, b3 = (params["w1"], params["b1"], params["w2"],
                              params["b2"], params["w3"], params["b3"])

    if tile_b is None:
        tile_b = 2048                 # 512-2048: amortizes ~0.35us/step grid overhead
    tile_b = max(8, _round_up(min(tile_b, max(B, 8)), 8))   # sublane-aligned, <= needed
    b_pad = _round_up(B, tile_b)
    if b_pad != B:
        x = jnp.pad(x, ((0, b_pad - B), (0, 0)))            # padded rows sliced off below
    num_tiles = b_pad // tile_b

    n_params = sum(int(a.size) for a in (w1, b1, w2, b2, w3, b3))
    cost = pl.CostEstimate(
        flops=2 * b_pad * (obs * 24 + 24 * 48 + 48),
        transcendentals=0,
        bytes_accessed=4 * (b_pad * obs + b_pad + n_params),
    )

    # Constant block index across the grid -> Pallas keeps these resident in VMEM
    # (no per-tile re-DMA of the parameters).
    resident = lambda a: pl.BlockSpec(a.shape, lambda i: (0, 0))

    out = pl.pallas_call(
        _value_mlp_kernel,
        out_shape=jax.ShapeDtypeStruct((b_pad, 1), jnp.float32),
        grid=(num_tiles,),
        in_specs=[
            pl.BlockSpec((tile_b, obs), lambda i: (i, 0)),   # only per-tile DMA stream
            resident(w1), resident(b1),
            resident(w2), resident(b2),
            resident(w3), resident(b3),
        ],
        out_specs=pl.BlockSpec((tile_b, 1), lambda i: (i, 0)),
        compiler_params=pltpu.CompilerParams(
            dimension_semantics=("parallel",),               # megacore split on v7x
        ),
        cost_estimate=cost,
    )(x, w1, b1, w2, b2, w3, b3)
    return out[:B]


def init_params(observation_size, key):
    """Deterministic init mimicking nn.Linear default (uniform(-1/sqrt(fan_in), +))."""
    keys = jax.random.split(key, 6)

    def linear(kw, kb, fan_in, fan_out):
        bound = 1.0 / (fan_in ** 0.5)
        # stored as (in_features, out_features) so kernel does x @ W
        w = jax.random.uniform(kw, (fan_in, fan_out), jnp.float32, -bound, bound)
        b = jax.random.uniform(kb, (1, fan_out), jnp.float32, -bound, bound)
        return w, b

    w1, b1 = linear(keys[0], keys[1], observation_size, 24)
    w2, b2 = linear(keys[2], keys[3], 24, 48)
    w3, b3 = linear(keys[4], keys[5], 48, 1)
    return {"w1": w1, "b1": b1, "w2": w2, "b2": b2,
            "w3": jnp.transpose(w3),    # kept as a (1, 48) row for the VPU layer-3 path
            "b3": b3}


def reference_forward(x, p):
    h1 = jnp.maximum(x @ p["w1"] + p["b1"], 0.0)
    h2 = jnp.maximum(h1 @ p["w2"] + p["b2"], 0.0)
    # Final layer written elementwise (== h2 @ w3.T + b3) so both sides use an
    # exact-f32 path rather than the MXU's default matmul precision.
    return jnp.sum(h2 * p["w3"], axis=-1, keepdims=True) + p["b3"]


if __name__ == "__main__":
    observation_size = 16

    key = jax.random.PRNGKey(0)
    k_params, k_small, k_big = jax.random.split(key, 3)
    params = init_params(observation_size, k_params)

    # Small single-tile case (typical per-step PPO use).
    x_small = jax.random.normal(k_small, (8, observation_size), jnp.float32)
    out_small = jax.block_until_ready(value_approximator_forward(x_small, params))
    ref_small = reference_forward(x_small, params)
    assert out_small.shape == (8, 1), out_small.shape
    assert jnp.allclose(out_small, ref_small, atol=1e-4, rtol=1e-4)

    # Multi-tile ragged batch: exercises the grid pipeline, resident weights, and
    # the pad-and-slice remainder handling (1000 rows -> 4 tiles of 256).
    x_big = jax.random.normal(k_big, (1000, observation_size), jnp.float32)
    out_big = jax.block_until_ready(
        value_approximator_forward(x_big, params, tile_b=256))
    ref_big = reference_forward(x_big, params)
    assert out_big.shape == (1000, 1), out_big.shape
    assert jnp.allclose(out_big, ref_big, atol=1e-4, rtol=1e-4)

    print("KERNEL_OK")
</pallas_src>

<mosaic_0001>
module attributes {stable_mosaic.version = 11 : i64} {
  func.func @_value_mlp_kernel(%arg0: i32, %arg1: memref<8x16xf32, #tpu.memory_space<vmem>>, %arg2: memref<16x24xf32, #tpu.memory_space<vmem>>, %arg3: memref<1x24xf32, #tpu.memory_space<vmem>>, %arg4: memref<24x48xf32, #tpu.memory_space<vmem>>, %arg5: memref<1x48xf32, #tpu.memory_space<vmem>>, %arg6: memref<1x48xf32, #tpu.memory_space<vmem>>, %arg7: memref<1x1xf32, #tpu.memory_space<vmem>>, %arg8: memref<8x1xf32, #tpu.memory_space<vmem>>) attributes {dimension_semantics = [#tpu.dimension_semantics<parallel>], iteration_bounds = array<i64: 1>, scalar_prefetch = 0 : i64, scratch_operands = 0 : i64, tpu.core_type = #tpu.core_type<tc>, window_params = [{transform_indices = @transform_0, window_bounds = array<i64: 8, 16>}, {pipeline_mode = #tpu.pipeline_mode<synchronous>, transform_indices = @transform_1, window_bounds = array<i64: 16, 24>}, {pipeline_mode = #tpu.pipeline_mode<synchronous>, transform_indices = @transform_2, window_bounds = array<i64: 1, 24>}, {pipeline_mode = #tpu.pipeline_mode<synchronous>, transform_indices = @transform_3, window_bounds = array<i64: 24, 48>}, {pipeline_mode = #tpu.pipeline_mode<synchronous>, transform_indices = @transform_4, window_bounds = array<i64: 1, 48>}, {pipeline_mode = #tpu.pipeline_mode<synchronous>, transform_indices = @transform_5, window_bounds = array<i64: 1, 48>}, {pipeline_mode = #tpu.pipeline_mode<synchronous>, transform_indices = @transform_6, window_bounds = array<i64: 1, 1>}, {transform_indices = @transform_7, window_bounds = array<i64: 8, 1>}]} {
    %c0 = arith.constant 0 : index
    %c0_0 = arith.constant 0 : index
    %0 = vector.load %arg1[%c0, %c0_0] : memref<8x16xf32, #tpu.memory_space<vmem>>, vector<8x16xf32>
    %c0_1 = arith.constant 0 : index
    %c0_2 = arith.constant 0 : index
    %1 = vector.load %arg2[%c0_1, %c0_2] : memref<16x24xf32, #tpu.memory_space<vmem>>, vector<16x24xf32>
    %cst = arith.constant dense<0.000000e+00> : vector<8x24xf32>
    %2 = tpu.matmul %0, %1, %cst {dimension_numbers = #tpu.dot_dimension_numbers<[1], [0], [0], [1], [0, 0, 1, 1], [], []>} : vector<8x16xf32>, vector<16x24xf32>, vector<8x24xf32> -> vector<8x24xf32>
    %c0_3 = arith.constant 0 : index
    %c0_4 = arith.constant 0 : index
    %3 = vector.load %arg3[%c0_3, %c0_4] : memref<1x24xf32, #tpu.memory_space<vmem>>, vector<1x24xf32>
    %4 = vector.broadcast %3 : vector<1x24xf32> to vector<8x24xf32>
    %5 = arith.addf %2, %4 : vector<8x24xf32>
    %cst_5 = arith.constant 0.000000e+00 : f32
    %6 = vector.broadcast %cst_5 : f32 to vector<8x24xf32>
    %7 = arith.maximumf %5, %6 : vector<8x24xf32>
    %c0_6 = arith.constant 0 : index
    %c0_7 = arith.constant 0 : index
    %8 = vector.load %arg4[%c0_6, %c0_7] : memref<24x48xf32, #tpu.memory_space<vmem>>, vector<24x48xf32>
    %cst_8 = arith.constant dense<0.000000e+00> : vector<8x48xf32>
    %9 = tpu.matmul %7, %8, %cst_8 {dimension_numbers = #tpu.dot_dimension_numbers<[1], [0], [0], [1], [0, 0, 1, 1], [], []>} : vector<8x24xf32>, vector<24x48xf32>, vector<8x48xf32> -> vector<8x48xf32>
    %c0_9 = arith.constant 0 : index
    %c0_10 = arith.constant 0 : index
    %10 = vector.load %arg5[%c0_9, %c0_10] : memref<1x48xf32, #tpu.memory_space<vmem>>, vector<1x48xf32>
    %11 = vector.broadcast %10 : vector<1x48xf32> to vector<8x48xf32>
    %12 = arith.addf %9, %11 : vector<8x48xf32>
    %cst_11 = arith.constant 0.000000e+00 : f32
    %13 = vector.broadcast %cst_11 : f32 to vector<8x48xf32>
    %14 = arith.maximumf %12, %13 : vector<8x48xf32>
    %c0_12 = arith.constant 0 : index
    %c0_13 = arith.constant 0 : index
    %15 = vector.load %arg6[%c0_12, %c0_13] : memref<1x48xf32, #tpu.memory_space<vmem>>, vector<1x48xf32>
    %16 = vector.broadcast %15 : vector<1x48xf32> to vector<8x48xf32>
    %17 = arith.mulf %14, %16 : vector<8x48xf32>
    %cst_14 = arith.constant dense<0.000000e+00> : vector<8xf32>
    %18 = vector.multi_reduction <add>, %17, %cst_14 [1] : vector<8x48xf32> to vector<8xf32>
    %19 = vector.shape_cast %18 : vector<8xf32> to vector<8x1xf32>
    %c0_15 = arith.constant 0 : index
    %c0_16 = arith.constant 0 : index
    %20 = vector.load %arg7[%c0_15, %c0_16] : memref<1x1xf32, #tpu.memory_space<vmem>>, vector<1x1xf32>
    %21 = vector.broadcast %20 : vector<1x1xf32> to vector<8x1xf32>
    %22 = arith.addf %19, %21 : vector<8x1xf32>
    %c0_17 = arith.constant 0 : index
    %c0_18 = arith.constant 0 : index
    %23 = vector.load %arg8[%c0_17, %c0_18] : memref<8x1xf32, #tpu.memory_space<vmem>>, vector<8x1xf32>
    tpu.vector_store %arg8[%c0_17, %c0_18], %22 {strides = array<i32>} : memref<8x1xf32, #tpu.memory_space<vmem>>, vector<8x1xf32>,
    return
  }
  func.func @transform_0(%arg0: i32) -> (i32, i32) {
    %c0_i32 = arith.constant 0 : i32
    %c0_i32_0 = arith.constant 0 : i32
    return %arg0, %c0_i32 : i32, i32
  }
  func.func @transform_1(%arg0: i32) -> (i32, i32) {
    %c0_i32 = arith.constant 0 : i32
    %c0_i32_0 = arith.constant 0 : i32
    %c0_i32_1 = arith.constant 0 : i32
    return %c0_i32, %c0_i32_0 : i32, i32
  }
  func.func @transform_2(%arg0: i32) -> (i32, i32) {
    %c0_i32 = arith.constant 0 : i32
    %c0_i32_0 = arith.constant 0 : i32
    %c0_i32_1 = arith.constant 0 : i32
    return %c0_i32, %c0_i32_0 : i32, i32
  }
  func.func @transform_3(%arg0: i32) -> (i32, i32) {
    %c0_i32 = arith.constant 0 : i32
    %c0_i32_0 = arith.constant 0 : i32
    %c0_i32_1 = arith.constant 0 : i32
    return %c0_i32, %c0_i32_0 : i32, i32
  }
  func.func @transform_4(%arg0: i32) -> (i32, i32) {
    %c0_i32 = arith.constant 0 : i32
    %c0_i32_0 = arith.constant 0 : i32
    %c0_i32_1 = arith.constant 0 : i32
    return %c0_i32, %c0_i32_0 : i32, i32
  }
  func.func @transform_5(%arg0: i32) -> (i32, i32) {
    %c0_i32 = arith.constant 0 : i32
    %c0_i32_0 = arith.constant 0 : i32
    %c0_i32_1 = arith.constant 0 : i32
    return %c0_i32, %c0_i32_0 : i32, i32
  }
  func.func @transform_6(%arg0: i32) -> (i32, i32) {
    %c0_i32 = arith.constant 0 : i32
    %c0_i32_0 = arith.constant 0 : i32
    %c0_i32_1 = arith.constant 0 : i32
    return %c0_i32, %c0_i32_0 : i32, i32
  }
  func.func @transform_7(%arg0: i32) -> (i32, i32) {
    %c0_i32 = arith.constant 0 : i32
    %c0_i32_0 = arith.constant 0 : i32
    return %arg0, %c0_i32 : i32, i32
  }
}

</mosaic_0001>

<llo_original>
// kernel: tpu_custom_call.1
$region0: #{tpu_custom_call.1}
  #allocation0 [shape = 'u32[]', space=smem, size = 0x4, offset = 0x4, fixed_abs, tag = 'smem constant byte address 0x4 - core index']
  #allocation1 [shape = 'u32[144,128]{1,0:T(1,128)}', space=vmem, size = 0x12000, scoped, tag = 'internal scratch']
  #allocation2 [shape = 'f32[1,1]{1,0:T(1,128)S(1)}', space=vmem, size = 0x200, scoped, tag = 'scoped memory for tpu_custom_call.1']
  %s0 = inlined_call_operand.hbm [shape: f32[8,16], index: 0, kind: input, shape index: {}]
  %s1 = inlined_call_operand.hbm [shape: f32[16,24], index: 1, kind: input, shape index: {}]
  %s2 = inlined_call_operand.vmem [shape: f32[1,24], index: 2, kind: input, shape index: {}]
  %s3 = inlined_call_operand.hbm [shape: f32[24,48], index: 3, kind: input, shape index: {}]
  %s4 = inlined_call_operand.vmem [shape: f32[1,48], index: 4, kind: input, shape index: {}]
  %s5 = inlined_call_operand.vmem [shape: f32[1,48], index: 5, kind: input, shape index: {}]
  %s6 = inlined_call_operand.<no memory space> [shape: f32[1,1], index: 6, kind: input, shape index: {}]
  %s7 = inlined_call_operand.vmem [shape: f32[8,1], index: 7, kind: output, shape index: {}]
  %s8 = sld [smem:[#allocation0]]
  $region50: #{tpu_custom_call.1} parent=0
    _
  %s10 = ssub.s32 1, %s8
  %s11 = scalar_select 0, %s10, %s8
  %v12 = vstv %s6
  %13 = vst [vmem:[#allocation2] sm:$0x1] %v12
  $region1: #{tpu_custom_call.1} parent=0
    #allocation3 [shape = 'u8[4096]{0}', space=vmem, size = 0x1000, scoped, tag = 'input window, operand 0, single buffered']
    #allocation4 [shape = 's32[1]{0}', space=sflag, size = 0x4, scoped, tag = 'scoped memory for tpu_custom_call.1']
    #allocation5 [shape = 'u8[8192]{0}', space=vmem, size = 0x2000, scoped, tag = 'input window, operand 1, single buffered']
    #allocation6 [shape = 's32[1]{0}', space=sflag, size = 0x4, scoped, tag = 'scoped memory for tpu_custom_call.1']
    #allocation7 [shape = 'u8[12288]{0}', space=vmem, size = 0x3000, scoped, tag = 'input window, operand 3, single buffered']
    %14 = vsyncpa [#allocation4], 0
    %15 = vsyncpa [#allocation6], 0
    // Predicated region
    $region2: #{tpu_custom_call.1} parent=1 // pred_check
      _
    $region3: #{tpu_custom_call.1} parent=1 // pred_check_branch
      %17 = sbr.rel (0) target = $region5
    $region4: #{tpu_custom_call.1} parent=1 // pred_region
      %s19 = ssub.s32 128, 128
      %20 = vsyncadd [#allocation4], %s19
      %s22 = sshll.u32 [#allocation3], 4
      %s23 = int_to_ptr.vmem [resolvable:$true] %s22
      %25 = dma.hbm_to_vmem [thread:$0]  %s0, 128, %s23, [#allocation4]
    $region5: #{tpu_custom_call.1} parent=1 // pred_fallthru
      _
    // Predicated region
    $region6: #{tpu_custom_call.1} parent=1 // pred_check
      _
    $region7: #{tpu_custom_call.1} parent=1 // pred_check_branch
      %27 = sbr.rel (0) target = $region9
    $region8: #{tpu_custom_call.1} parent=1 // pred_region
      %s29 = ssub.s32 256, 256
      %30 = vsyncadd [#allocation6], %s29
      %s31 = sshll.u32 [#allocation5], 4
      %s32 = int_to_ptr.vmem [resolvable:$true] %s31
      %37 = dma.hbm_to_vmem [thread:$0]  %s1, 256, %s32, [#allocation6], 128, 128, 8
    $region9: #{tpu_custom_call.1} parent=1 // pred_fallthru
      _
    // Predicated region
    $region10: #{tpu_custom_call.1} parent=1 // pred_check
      _
    $region11: #{tpu_custom_call.1} parent=1 // pred_check_branch
      %39 = sbr.rel (0) target = $region13
    $region12: #{tpu_custom_call.1} parent=1 // pred_region
      _
    $region13: #{tpu_custom_call.1} parent=1 // pred_fallthru
      _
    // Predicated region
    $region14: #{tpu_custom_call.1} parent=1 // pred_check
      _
    $region15: #{tpu_custom_call.1} parent=1 // pred_check_branch
      %41 = sbr.rel (0) target = $region17
    $region16: #{tpu_custom_call.1} parent=1 // pred_region
      %s43 = ssub.s32 384, 384
      %44 = vsyncadd [#allocation6], %s43
      %s45 = sshll.u32 [#allocation7], 4
      %s46 = int_to_ptr.vmem [resolvable:$true] %s45
      %51 = dma.hbm_to_vmem [thread:$0]  %s3, 384, %s46, [#allocation6], 128, 128, 8
    $region17: #{tpu_custom_call.1} parent=1 // pred_fallthru
      _
    // Predicated region
    $region18: #{tpu_custom_call.1} parent=1 // pred_check
      _
    $region19: #{tpu_custom_call.1} parent=1 // pred_check_branch
      %53 = sbr.rel (0) target = $region21
    $region20: #{tpu_custom_call.1} parent=1 // pred_region
      _
    $region21: #{tpu_custom_call.1} parent=1 // pred_fallthru
      _
    // Predicated region
    $region22: #{tpu_custom_call.1} parent=1 // pred_check
      _
    $region23: #{tpu_custom_call.1} parent=1 // pred_check_branch
      %55 = sbr.rel (0) target = $region25
    $region24: #{tpu_custom_call.1} parent=1 // pred_region
      _
    $region25: #{tpu_custom_call.1} parent=1 // pred_fallthru
      _
    // Predicated region
    $region26: #{tpu_custom_call.1} parent=1 // pred_check
      _
    $region27: #{tpu_custom_call.1} parent=1 // pred_check_branch
      %57 = sbr.rel (0) target = $region29
    $region28: #{tpu_custom_call.1} parent=1 // pred_region
      _
    $region29: #{tpu_custom_call.1} parent=1 // pred_fallthru
      _
    // Predicated region
    $region30: #{tpu_custom_call.1} parent=1 // pred_check
      _
    $region31: #{tpu_custom_call.1} parent=1 // pred_check_branch
      %59 = sbr.rel (0) target = $region33
    $region32: #{tpu_custom_call.1} parent=1 // pred_region
      %60 = dma.done [#allocation4], 128
    $region33: #{tpu_custom_call.1} parent=1 // pred_fallthru
      _
    // Predicated region
    $region34: #{tpu_custom_call.1} parent=1 // pred_check
      _
    $region35: #{tpu_custom_call.1} parent=1 // pred_check_branch
      %62 = sbr.rel (0) target = $region37
    $region36: #{tpu_custom_call.1} parent=1 // pred_region
      %63 = dma.done [#allocation6], 256
    $region37: #{tpu_custom_call.1} parent=1 // pred_fallthru
      _
    // Predicated region
    $region38: #{tpu_custom_call.1} parent=1 // pred_check
      _
    $region39: #{tpu_custom_call.1} parent=1 // pred_check_branch
      %65 = sbr.rel (0) target = $region41
    $region40: #{tpu_custom_call.1} parent=1 // pred_region
      %66 = dma.done [#allocation6], 384
    $region41: #{tpu_custom_call.1} parent=1 // pred_fallthru
      _
    %v67 = vld [vmem:[#allocation3] sm:$0xff]
    %v68 = vld [vmem:[#allocation5] sm:$0xff]
    %v69 = vld [vmem:[#allocation5 + $0x8] sm:$0xff]
    %v70 = vld [vmem:[%s2] sm:$0x1]
    %v72 = vlaneseq
    %v73 = vshrl.u32 %v72, 7
    %v74 = vsub.s32 0, %v73
    %v75 = vrot.slane %v70, %v74
    %vm77 = vcmask 130048
    %v79 = vsel %vm77, %v67, 0
    %81 = vmatprep.subr.mxu0 0.0
    %82 = vmatpush1.msra.mxu0 %v68
    %83 = vmatprep.subr.mxu0 0.0
    %84 = vmatpush1.msra.mxu0 %v69
    %85 = vmatprep.subr.mxu0 0.0
    %86 = vmatpush1.msra.mxu0 0.0
    %87 = vmatprep.subr.mxu0 0.0
    %88 = vmatpush1.msra.mxu0 0.0
    %89 = vmatprep.subr.mxu0 0.0
    %90 = vmatpush1.msra.mxu0 0.0
    %91 = vmatprep.subr.mxu0 0.0
    %92 = vmatpush1.msra.mxu0 0.0
    %93 = vmatprep.subr.mxu0 0.0
    %94 = vmatpush1.msra.mxu0 0.0
    %95 = vmatprep.subr.mxu0 0.0
    %96 = vmatpush1.msra.mxu0 0.0
    %97 = vmatprep.subr.mxu0 0.0
    %98 = vmatpush1.msra.mxu0 0.0
    %99 = vmatprep.subr.mxu0 0.0
    %100 = vmatpush1.msra.mxu0 0.0
    %101 = vmatprep.subr.mxu0 0.0
    %102 = vmatpush1.msra.mxu0 0.0
    %103 = vmatprep.subr.mxu0 0.0
    %104 = vmatpush1.msra.mxu0 0.0
    %105 = vmatprep.subr.mxu0 0.0
    %106 = vmatpush1.msra.mxu0 0.0
    %107 = vmatprep.subr.mxu0 0.0
    %108 = vmatpush1.msra.mxu0 0.0
    %109 = vmatprep.subr.mxu0 0.0
    %110 = vmatpush1.msra.mxu0 0.0
    %111 = vmatprep.subr.mxu0 0.0
    %112 = vmatpush1.msra.mxu0 0.0
    %113 = vmatprep.subr.mxu0 0.0
    %114 = vmatpush1.msra.mxu0 0.0
    %115 = vmatprep.subr.mxu0 0.0
    %116 = vmatpush1.msra.mxu0 0.0
    %117 = vmatprep.subr.mxu0 0.0
    %118 = vmatpush1.msra.mxu0 0.0
    %119 = vmatprep.subr.mxu0 0.0
    %120 = vmatpush1.msra.mxu0 0.0
    %121 = vmatprep.subr.mxu0 0.0
    %122 = vmatpush1.msra.mxu0 0.0
    %123 = vmatprep.subr.mxu0 0.0
    %124 = vmatpush1.msra.mxu0 0.0
    %125 = vmatprep.subr.mxu0 0.0
    %126 = vmatpush1.msra.mxu0 0.0
    %127 = vmatprep.subr.mxu0 0.0
    %128 = vmatpush1.msra.mxu0 0.0
    %129 = vmatprep.subr.mxu0 0.0
    %130 = vmatpush1.msra.mxu0 0.0
    %131 = vmatprep.subr.mxu0 0.0
    %132 = vmatpush1.msra.mxu0 0.0
    %133 = vmatprep.subr.mxu0 0.0
    %134 = vmatpush1.msra.mxu0 0.0
    %135 = vmatprep.subr.mxu0 0.0
    %136 = vmatpush1.msra.mxu0 0.0
    %137 = vmatprep.subr.mxu0 0.0
    %138 = vmatpush1.msra.mxu0 0.0
    %139 = vmatprep.subr.mxu0 0.0
    %140 = vmatpush1.msra.mxu0 0.0
    %141 = vmatprep.subr.mxu0 0.0
    %142 = vmatpush1.msra.mxu0 0.0
    %143 = vmatprep.subr.mxu0 0.0
    %144 = vmatpush1.msra.mxu0 0.0
    %145 = vmatprep.mubr.f32.mxu0 0.0
    %146 = vmatmul.mubr.f32.gmra.mrb[0].mxu0 %v79
    %v147 = vpop.f32.mrb[0].mxu0
    %v148 = vadd.f32 %v75, %v147
    %v149 = vpop.f32.mrb[0].mxu0
    %150 = vdwg.mxu0
    %v151 = vmax.f32 %v148, 0.0
    %v152 = vld [vmem:[#allocation7] sm:$0xff]
    %v153 = vld [vmem:[#allocation7 + $0x8] sm:$0xff]
    %v154 = vld [vmem:[#allocation7 + $0x10] sm:$0xff]
    %v155 = vld [vmem:[%s4] sm:$0x1]
    %v157 = vlaneseq
    %v158 = vshrl.u32 %v157, 7
    %v159 = vsub.s32 0, %v158
    %v160 = vrot.slane %v155, %v159
    %vm162 = vcmask 195584
    %v164 = vsel %vm162, %v151, 0
    %166 = vmatprep.subr.mxu0 0.0
    %167 = vmatpush1.msra.mxu0 %v152
    %168 = vmatprep.subr.mxu0 0.0
    %169 = vmatpush1.msra.mxu0 %v153
    %170 = vmatprep.subr.mxu0 0.0
    %171 = vmatpush1.msra.mxu0 %v154
    %172 = vmatprep.subr.mxu0 0.0
    %173 = vmatpush1.msra.mxu0 0.0
    %174 = vmatprep.subr.mxu0 0.0
    %175 = vmatpush1.msra.mxu0 0.0
    %176 = vmatprep.subr.mxu0 0.0
    %177 = vmatpush1.msra.mxu0 0.0
    %178 = vmatprep.subr.mxu0 0.0
    %179 = vmatpush1.msra.mxu0 0.0
    %180 = vmatprep.subr.mxu0 0.0
    %181 = vmatpush1.msra.mxu0 0.0
    %182 = vmatprep.subr.mxu0 0.0
    %183 = vmatpush1.msra.mxu0 0.0
    %184 = vmatprep.subr.mxu0 0.0
    %185 = vmatpush1.msra.mxu0 0.0
    %186 = vmatprep.subr.mxu0 0.0
    %187 = vmatpush1.msra.mxu0 0.0
    %188 = vmatprep.subr.mxu0 0.0
    %189 = vmatpush1.msra.mxu0 0.0
    %190 = vmatprep.subr.mxu0 0.0
    %191 = vmatpush1.msra.mxu0 0.0
    %192 = vmatprep.subr.mxu0 0.0
    %193 = vmatpush1.msra.mxu0 0.0
    %194 = vmatprep.subr.mxu0 0.0
    %195 = vmatpush1.msra.mxu0 0.0
    %196 = vmatprep.subr.mxu0 0.0
    %197 = vmatpush1.msra.mxu0 0.0
    %198 = vmatprep.subr.mxu0 0.0
    %199 = vmatpush1.msra.mxu0 0.0
    %200 = vmatprep.subr.mxu0 0.0
    %201 = vmatpush1.msra.mxu0 0.0
    %202 = vmatprep.subr.mxu0 0.0
    %203 = vmatpush1.msra.mxu0 0.0
    %204 = vmatprep.subr.mxu0 0.0
    %205 = vmatpush1.msra.mxu0 0.0
    %206 = vmatprep.subr.mxu0 0.0
    %207 = vmatpush1.msra.mxu0 0.0
    %208 = vmatprep.subr.mxu0 0.0
    %209 = vmatpush1.msra.mxu0 0.0
    %210 = vmatprep.subr.mxu0 0.0
    %211 = vmatpush1.msra.mxu0 0.0
    %212 = vmatprep.subr.mxu0 0.0
    %213 = vmatpush1.msra.mxu0 0.0
    %214 = vmatprep.subr.mxu0 0.0
    %215 = vmatpush1.msra.mxu0 0.0
    %216 = vmatprep.subr.mxu0 0.0
    %217 = vmatpush1.msra.mxu0 0.0
    %218 = vmatprep.subr.mxu0 0.0
    %219 = vmatpush1.msra.mxu0 0.0
    %220 = vmatprep.subr.mxu0 0.0
    %221 = vmatpush1.msra.mxu0 0.0
    %222 = vmatprep.subr.mxu0 0.0
    %223 = vmatpush1.msra.mxu0 0.0
    %224 = vmatprep.subr.mxu0 0.0
    %225 = vmatpush1.msra.mxu0 0.0
    %226 = vmatprep.subr.mxu0 0.0
    %227 = vmatpush1.msra.mxu0 0.0
    %228 = vmatprep.subr.mxu0 0.0
    %229 = vmatpush1.msra.mxu0 0.0
    %230 = vmatprep.mubr.f32.mxu0 0.0
    %231 = vmatmul.mubr.f32.gmra.mrb[0].mxu0 %v164
    %v232 = vpop.f32.mrb[0].mxu0
    %v233 = vadd.f32 %v160, %v232
    %v234 = vpop.f32.mrb[0].mxu0
    %235 = vdwg.mxu0
    %v236 = vmax.f32 %v233, 0.0
    %v237 = vld [vmem:[%s5] sm:$0x1]
    %v239 = vlaneseq
    %v240 = vshrl.u32 %v239, 7
    %v241 = vsub.s32 0, %v240
    %v242 = vrot.slane %v237, %v241
    %v244 = vmul.f32 %v236, %v242
    %vm245 = vcmask 392192
    %v246 = vsel %vm245, %v244, 0.0
    %247 = vadd.xlane.f32.xlu0 %v246
    %v248 = vpop.xlane.xlu0 %247
    %v249 = vld [vmem:[#allocation2] sm:$0x1]
    %v251 = vlaneseq
    %v252 = vshrl.u32 %v251, 7
    %v253 = vsub.s32 0, %v252
    %v254 = vrot.slane %v249, %v253
    %v256 = vadd.f32 %v248, %v254
    %vm257 = vcmask 7168
    %258 = vst.msk [vmem:[%s7] sm:$0xff] %vm257, %v256
    // Predicated region
    $region42: #{tpu_custom_call.1} parent=1 // pred_check
      _
    $region43: #{tpu_custom_call.1} parent=1 // pred_check_branch
      %260 = sbr.rel (0) target = $region45
    $region44: #{tpu_custom_call.1} parent=1 // pred_region
      _
    $region45: #{tpu_custom_call.1} parent=1 // pred_fallthru
      _
    // Predicated region
    $region46: #{tpu_custom_call.1} parent=1 // pred_check
      _
    $region47: #{tpu_custom_call.1} parent=1 // pred_check_branch
      %262 = sbr.rel (0) target = $region49
    $region48: #{tpu_custom_call.1} parent=1 // pred_region
      _
    $region49: #{tpu_custom_call.1} parent=1 // pred_fallthru
      _
    %263 = vsyncpa [#allocation4], 1
    %264 = vsyncpa [#allocation6], 1

</llo_original>
